<compile_context>
chip_gen: v5e
topology: v5e:2x2
jax: 0.10.0
libtpu: 0.0.40
codegen_flags: <defaults>
</compile_context>

<pallas_src>
import jax
import jax.numpy as jnp
from jax.experimental import pallas as pl
from jax.experimental.pallas import tpu as pltpu

_LANES = 128


def _make_stats_kernel(tr, sub, rows, needs_mask):
    """Per-tile partial sums / sums-of-squares for xv and xt.

    acc_ref (output, f32[4, sub, 128]) rows: 0=sum(xv), 1=sum(xt),
    2=sum(xv^2), 3=sum(xt^2).  The output block index is constant across the
    grid, so it acts as a resident accumulator (init at tile 0, written back
    to HBM once after the last tile).
    """

    def stats_kernel(xv_ref, xt_ref, acc_ref):
        t = pl.program_id(0)

        @pl.when(t == 0)
        def _init():
            acc_ref[...] = jnp.zeros_like(acc_ref)

        xv = xv_ref[...]                       # (tr, 128)
        xt = xt_ref[...]
        if needs_mask:
            # Ragged last tile: rows beyond the array extent hold undefined
            # VMEM contents; zero them so they never bias the statistics.
            row = jax.lax.broadcasted_iota(jnp.int32, (tr, 1), 0) + t * tr
            valid = row < rows
            xv = jnp.where(valid, xv, 0.0)
            xt = jnp.where(valid, xt, 0.0)

        def partial(x):
            # Per-sublane partial sums: (tr,128) -> (tr/sub, sub, 128) -> (sub,128).
            # Reduction over the leading (vreg-major) axis is plain VPU adds.
            return jnp.sum(x.reshape(-1, sub, _LANES), axis=0)

        acc_ref[0] = acc_ref[0] + partial(xv)
        acc_ref[1] = acc_ref[1] + partial(xt)
        acc_ref[2] = acc_ref[2] + partial(xv * xv)
        acc_ref[3] = acc_ref[3] + partial(xt * xt)

    return stats_kernel


def _normalize_kernel(p_ref, xv_ref, xt_ref, o_ref):
    # p_ref (SMEM, f32[7]): [wv, bv, wt, bt, a0, a1, c]  (BN+Wz already folded)
    wv, bv = p_ref[0], p_ref[1]
    wt, bt = p_ref[2], p_ref[3]
    a0, a1, c = p_ref[4], p_ref[5], p_ref[6]

    xv = xv_ref[...]                           # (tr, 128)
    xt = xt_ref[...]
    hv = jnp.tanh(xv * wv + bv)                # tanh(Wv(xv))
    ht = jnp.tanh(xt * wt + bt)                # tanh(Wt(xt))
    z = jax.nn.sigmoid(xv * a0 + xt * a1 + c)  # sigmoid(Wz(bn(cat(xv, xt))))
    # h = sigmoid(hv*z + ht*(1-z)) == sigmoid(ht + z*(hv - ht))
    o_ref[...] = jax.nn.sigmoid(ht + z * (hv - ht)).astype(o_ref.dtype)


def gated_attention(xv, xt, params, *, tile_rows=2048):
    """xv, xt: [B, 1] f32.  params: f32[12] packed parameter vector.

    params = [wv, bv, wt, bt, wz0, wz1, bz, gamma0, gamma1, beta0, beta1, eps]
    """
    assert xv.shape == xt.shape and xv.ndim == 2 and xv.shape[1] == 1
    assert tile_rows > 0 and tile_rows % 8 == 0
    B = xv.shape[0]

    # Lane-dense view of the batch: (rows, 128).  The reshape is free; a pad
    # (one copy per input) is needed only when B is not a multiple of 128.
    rows = -(-B // _LANES)
    bp = rows * _LANES

    def to_lane_dense(x):
        flat = x.reshape(-1).astype(jnp.float32)
        if bp != B:
            flat = jnp.pad(flat, (0, bp - B))
        return flat.reshape(rows, _LANES)

    xv2 = to_lane_dense(xv)
    xt2 = to_lane_dense(xt)

    if rows <= tile_rows:
        tr = rows                      # single tile, full extent
        num_tiles = 1
    else:
        tr = tile_rows                 # multiple of 8 -> (8,128)-aligned blocks
        num_tiles = -(-rows // tr)
    sub = 8 if tr % 8 == 0 else 1
    needs_mask = (rows % tr) != 0      # static: only mask when a tile is ragged

    x_spec = pl.BlockSpec((tr, _LANES), lambda t: (t, 0))
    cp_seq = pltpu.CompilerParams(dimension_semantics=("arbitrary",),
                                  vmem_limit_bytes=32 << 20)
    cp_par = pltpu.CompilerParams(dimension_semantics=("parallel",),
                                  vmem_limit_bytes=32 << 20)

    # ---- Pass 1: BatchNorm statistics (partial sums, accumulator output) ----
    partials = pl.pallas_call(
        _make_stats_kernel(tr, sub, rows, needs_mask),
        out_shape=jax.ShapeDtypeStruct((4, sub, _LANES), jnp.float32),
        grid_spec=pltpu.PrefetchScalarGridSpec(
            num_scalar_prefetch=0,
            grid=(num_tiles,),
            in_specs=[x_spec, x_spec],
            out_specs=pl.BlockSpec((4, sub, _LANES), lambda t: (0, 0, 0)),
        ),
        compiler_params=cp_seq,
    )(xv2, xt2)

    # ---- Fold BN affine + Wz into scalars (tiny XLA ops, hoisted off the
    # per-tile hot path).  Divide by the true B so lane padding never biases
    # the statistics (padded elements contributed exactly zero above). ----
    p = params.astype(jnp.float32)
    wv, bv, wt, bt = p[0], p[1], p[2], p[3]
    wz0, wz1, bz = p[4], p[5], p[6]
    g0, g1, be0, be1, eps = p[7], p[8], p[9], p[10], p[11]

    s = jnp.sum(partials, axis=(1, 2))         # [sum_v, sum_t, sq_v, sq_t]
    inv_n = 1.0 / B
    mean0, mean1 = s[0] * inv_n, s[1] * inv_n
    # TODO(synk): E[x^2]-mean^2 can cancel when |mean| >> std; the (8,128) f32
    # partials mitigate but do not remove this (train-mode biased variance).
    var0 = s[2] * inv_n - mean0 * mean0
    var1 = s[3] * inv_n - mean1 * mean1
    scale0 = g0 * jax.lax.rsqrt(var0 + eps)
    scale1 = g1 * jax.lax.rsqrt(var1 + eps)
    shift0 = be0 - mean0 * scale0
    shift1 = be1 - mean1 * scale1
    a0 = scale0 * wz0
    a1 = scale1 * wz1
    c = shift0 * wz0 + shift1 * wz1 + bz
    p_fold = jnp.stack([wv, bv, wt, bt, a0, a1, c])

    # ---- Pass 2: element-wise normalize / gate / blend (parallel tiles) ----
    out = pl.pallas_call(
        _normalize_kernel,
        out_shape=jax.ShapeDtypeStruct((rows, _LANES), jnp.float32),
        grid_spec=pltpu.PrefetchScalarGridSpec(
            num_scalar_prefetch=0,
            grid=(num_tiles,),
            in_specs=[
                pl.BlockSpec(memory_space=pltpu.MemorySpace.SMEM),   # folded params
                x_spec,                                              # xv
                x_spec,                                              # xt
            ],
            out_specs=x_spec,
        ),
        compiler_params=cp_par,
    )(p_fold, xv2, xt2)

    out_flat = out.reshape(-1)
    if bp != B:
        out_flat = out_flat[:B]
    return out_flat.reshape(B, 1)


def reference(xv, xt, params):
    """Pure-JAX reference mirroring the PyTorch forward (train-mode BN)."""
    wv, bv, wt, bt, wz0, wz1, bz, g0, g1, be0, be1, eps = [params[i] for i in range(12)]
    hv = jnp.tanh(xv * wv + bv)
    ht = jnp.tanh(xt * wt + bt)
    x = jnp.concatenate([xv, xt], axis=-1)               # (B, 2)
    mean = jnp.mean(x, axis=0, keepdims=True)
    var = jnp.mean((x - mean) ** 2, axis=0, keepdims=True)
    gamma = jnp.stack([g0, g1])[None, :]
    beta = jnp.stack([be0, be1])[None, :]
    xn = (x - mean) * jax.lax.rsqrt(var + eps) * gamma + beta
    z = jax.nn.sigmoid(xn[:, 0:1] * wz0 + xn[:, 1:2] * wz1 + bz)
    return jax.nn.sigmoid(hv * z + ht * (1.0 - z))


if __name__ == "__main__":
    key = jax.random.PRNGKey(0)
    k_w, k_xv1, k_xt1, k_xv2, k_xt2, k_xv3, k_xt3 = jax.random.split(key, 7)

    # Deterministic synthetic parameters:
    #   Wv: Linear(1,1), Wt: Linear(1,1), Wz: Linear(2,1), BN affine init.
    w = jax.random.uniform(k_w, (7,), minval=-1.0, maxval=1.0, dtype=jnp.float32)
    params = jnp.concatenate([
        w,                                                             # wv,bv,wt,bt,wz0,wz1,bz
        jnp.array([1.0, 1.0, 0.0, 0.0, 1e-5], dtype=jnp.float32),      # g0,g1,be0,be1,eps
    ])

    fn = jax.jit(gated_attention, static_argnames=("tile_rows",))

    # Case 1: module-scale smoke test (B=8): single tile, lane-padding path.
    B1 = 8
    xv1 = jax.random.normal(k_xv1, (B1, 1), dtype=jnp.float32)
    xt1 = jax.random.normal(k_xt1, (B1, 1), dtype=jnp.float32)
    out1 = jax.block_until_ready(fn(xv1, xt1, params))
    ref1 = reference(xv1, xt1, params)
    assert out1.shape == (B1, 1)
    assert jnp.allclose(out1, ref1, atol=1e-5, rtol=1e-5)

    # Case 2: B=3000 with tile_rows=16: multi-tile grid with a ragged last
    # tile (rows=24 -> tiles 16+8, in-kernel mask) plus lane padding (->3072).
    B2 = 3000
    xv2 = jax.random.normal(k_xv2, (B2, 1), dtype=jnp.float32)
    xt2 = jax.random.normal(k_xt2, (B2, 1), dtype=jnp.float32)
    out2 = jax.block_until_ready(fn(xv2, xt2, params, tile_rows=16))
    ref2 = reference(xv2, xt2, params)
    assert out2.shape == (B2, 1)
    assert jnp.allclose(out2, ref2, atol=1e-5, rtol=1e-5)

    # Case 3: B=2048 (multiple of 128): zero wrapper-side copies, exact tiles.
    B3 = 2048
    xv3 = jax.random.normal(k_xv3, (B3, 1), dtype=jnp.float32)
    xt3 = jax.random.normal(k_xt3, (B3, 1), dtype=jnp.float32)
    out3 = jax.block_until_ready(fn(xv3, xt3, params, tile_rows=8))
    ref3 = reference(xv3, xt3, params)
    assert out3.shape == (B3, 1)
    assert jnp.allclose(out3, ref3, atol=1e-5, rtol=1e-5)

    print("KERNEL_OK")
</pallas_src>

<mosaic_0001>
module attributes {stable_mosaic.version = 11 : i64} {
  func.func @stats_kernel(%arg0: i32, %arg1: memref<1x128xf32, #tpu.memory_space<vmem>>, %arg2: memref<1x128xf32, #tpu.memory_space<vmem>>, %arg3: memref<4x1x128xf32, #tpu.memory_space<vmem>>) attributes {dimension_semantics = [#tpu.dimension_semantics<arbitrary>], iteration_bounds = array<i64: 1>, scalar_prefetch = 0 : i64, scratch_operands = 0 : i64, tpu.core_type = #tpu.core_type<tc>, window_params = [{transform_indices = @transform_0, window_bounds = array<i64: 1, 128>}, {transform_indices = @transform_1, window_bounds = array<i64: 1, 128>}, {pipeline_mode = #tpu.pipeline_mode<synchronous>, transform_indices = @transform_2, window_bounds = array<i64: 4, 1, 128>}]} {
    %c0_i32 = arith.constant 0 : i32
    %0 = arith.cmpi eq, %arg0, %c0_i32 : i32
    %1 = arith.extui %0 : i1 to i32
    %c0_i32_0 = arith.constant 0 : i32
    %2 = arith.cmpi ne, %1, %c0_i32_0 : i32
    scf.if %2 {
      %cst_28 = arith.constant 0.000000e+00 : f32
      %39 = vector.broadcast %cst_28 : f32 to vector<4x1x128xf32>
      %c0_29 = arith.constant 0 : index
      %c0_30 = arith.constant 0 : index
      %c0_31 = arith.constant 0 : index
      %40 = vector.load %arg3[%c0_29, %c0_30, %c0_31] : memref<4x1x128xf32, #tpu.memory_space<vmem>>, vector<4x1x128xf32>
      tpu.vector_store %arg3[%c0_29, %c0_30, %c0_31], %39 {strides = array<i32>} : memref<4x1x128xf32, #tpu.memory_space<vmem>>, vector<4x1x128xf32>,
    } else {
    }
    %c0 = arith.constant 0 : index
    %c0_1 = arith.constant 0 : index
    %3 = vector.load %arg1[%c0, %c0_1] : memref<1x128xf32, #tpu.memory_space<vmem>>, vector<1x128xf32>
    %c0_2 = arith.constant 0 : index
    %c0_3 = arith.constant 0 : index
    %4 = vector.load %arg2[%c0_2, %c0_3] : memref<1x128xf32, #tpu.memory_space<vmem>>, vector<1x128xf32>
    %c0_4 = arith.constant 0 : index
    %c0_5 = arith.constant 0 : index
    %c0_6 = arith.constant 0 : index
    %5 = vector.load %arg3[%c0_4, %c0_5, %c0_6] : memref<4x1x128xf32, #tpu.memory_space<vmem>>, vector<1x1x128xf32>
    %6 = vector.shape_cast %5 : vector<1x1x128xf32> to vector<1x128xf32>
    %7 = vector.shape_cast %3 : vector<1x128xf32> to vector<1x1x128xf32>
    %cst = arith.constant dense<0.000000e+00> : vector<1x128xf32>
    %8 = vector.multi_reduction <add>, %7, %cst [0] : vector<1x1x128xf32> to vector<1x128xf32>
    %9 = arith.addf %6, %8 : vector<1x128xf32>
    %c0_7 = arith.constant 0 : index
    %c0_8 = arith.constant 0 : index
    %c0_9 = arith.constant 0 : index
    %10 = vector.load %arg3[%c0_7, %c0_8, %c0_9] : memref<4x1x128xf32, #tpu.memory_space<vmem>>, vector<1x1x128xf32>
    %11 = vector.shape_cast %10 : vector<1x1x128xf32> to vector<1x128xf32>
    %12 = vector.shape_cast %9 : vector<1x128xf32> to vector<1x1x128xf32>
    tpu.vector_store %arg3[%c0_7, %c0_8, %c0_9], %12 {strides = array<i32>} : memref<4x1x128xf32, #tpu.memory_space<vmem>>, vector<1x1x128xf32>,
    %c1 = arith.constant 1 : index
    %c0_10 = arith.constant 0 : index
    %c0_11 = arith.constant 0 : index
    %13 = vector.load %arg3[%c1, %c0_10, %c0_11] : memref<4x1x128xf32, #tpu.memory_space<vmem>>, vector<1x1x128xf32>
    %14 = vector.shape_cast %13 : vector<1x1x128xf32> to vector<1x128xf32>
    %15 = vector.shape_cast %4 : vector<1x128xf32> to vector<1x1x128xf32>
    %cst_12 = arith.constant dense<0.000000e+00> : vector<1x128xf32>
    %16 = vector.multi_reduction <add>, %15, %cst_12 [0] : vector<1x1x128xf32> to vector<1x128xf32>
    %17 = arith.addf %14, %16 : vector<1x128xf32>
    %c1_13 = arith.constant 1 : index
    %c0_14 = arith.constant 0 : index
    %c0_15 = arith.constant 0 : index
    %18 = vector.load %arg3[%c1_13, %c0_14, %c0_15] : memref<4x1x128xf32, #tpu.memory_space<vmem>>, vector<1x1x128xf32>
    %19 = vector.shape_cast %18 : vector<1x1x128xf32> to vector<1x128xf32>
    %20 = vector.shape_cast %17 : vector<1x128xf32> to vector<1x1x128xf32>
    tpu.vector_store %arg3[%c1_13, %c0_14, %c0_15], %20 {strides = array<i32>} : memref<4x1x128xf32, #tpu.memory_space<vmem>>, vector<1x1x128xf32>,
    %c2 = arith.constant 2 : index
    %c0_16 = arith.constant 0 : index
    %c0_17 = arith.constant 0 : index
    %21 = vector.load %arg3[%c2, %c0_16, %c0_17] : memref<4x1x128xf32, #tpu.memory_space<vmem>>, vector<1x1x128xf32>
    %22 = vector.shape_cast %21 : vector<1x1x128xf32> to vector<1x128xf32>
    %23 = arith.mulf %3, %3 : vector<1x128xf32>
    %24 = vector.shape_cast %23 : vector<1x128xf32> to vector<1x1x128xf32>
    %cst_18 = arith.constant dense<0.000000e+00> : vector<1x128xf32>
    %25 = vector.multi_reduction <add>, %24, %cst_18 [0] : vector<1x1x128xf32> to vector<1x128xf32>
    %26 = arith.addf %22, %25 : vector<1x128xf32>
    %c2_19 = arith.constant 2 : index
    %c0_20 = arith.constant 0 : index
    %c0_21 = arith.constant 0 : index
    %27 = vector.load %arg3[%c2_19, %c0_20, %c0_21] : memref<4x1x128xf32, #tpu.memory_space<vmem>>, vector<1x1x128xf32>
    %28 = vector.shape_cast %27 : vector<1x1x128xf32> to vector<1x128xf32>
    %29 = vector.shape_cast %26 : vector<1x128xf32> to vector<1x1x128xf32>
    tpu.vector_store %arg3[%c2_19, %c0_20, %c0_21], %29 {strides = array<i32>} : memref<4x1x128xf32, #tpu.memory_space<vmem>>, vector<1x1x128xf32>,
    %c3 = arith.constant 3 : index
    %c0_22 = arith.constant 0 : index
    %c0_23 = arith.constant 0 : index
    %30 = vector.load %arg3[%c3, %c0_22, %c0_23] : memref<4x1x128xf32, #tpu.memory_space<vmem>>, vector<1x1x128xf32>
    %31 = vector.shape_cast %30 : vector<1x1x128xf32> to vector<1x128xf32>
    %32 = arith.mulf %4, %4 : vector<1x128xf32>
    %33 = vector.shape_cast %32 : vector<1x128xf32> to vector<1x1x128xf32>
    %cst_24 = arith.constant dense<0.000000e+00> : vector<1x128xf32>
    %34 = vector.multi_reduction <add>, %33, %cst_24 [0] : vector<1x1x128xf32> to vector<1x128xf32>
    %35 = arith.addf %31, %34 : vector<1x128xf32>
    %c3_25 = arith.constant 3 : index
    %c0_26 = arith.constant 0 : index
    %c0_27 = arith.constant 0 : index
    %36 = vector.load %arg3[%c3_25, %c0_26, %c0_27] : memref<4x1x128xf32, #tpu.memory_space<vmem>>, vector<1x1x128xf32>
    %37 = vector.shape_cast %36 : vector<1x1x128xf32> to vector<1x128xf32>
    %38 = vector.shape_cast %35 : vector<1x128xf32> to vector<1x1x128xf32>
    tpu.vector_store %arg3[%c3_25, %c0_26, %c0_27], %38 {strides = array<i32>} : memref<4x1x128xf32, #tpu.memory_space<vmem>>, vector<1x1x128xf32>,
    return
  }
  func.func @transform_0(%arg0: i32) -> (i32, i32) {
    %c0_i32 = arith.constant 0 : i32
    %c0_i32_0 = arith.constant 0 : i32
    return %arg0, %c0_i32 : i32, i32
  }
  func.func @transform_1(%arg0: i32) -> (i32, i32) {
    %c0_i32 = arith.constant 0 : i32
    %c0_i32_0 = arith.constant 0 : i32
    return %arg0, %c0_i32 : i32, i32
  }
  func.func @transform_2(%arg0: i32) -> (i32, i32, i32) {
    %c0_i32 = arith.constant 0 : i32
    %c0_i32_0 = arith.constant 0 : i32
    %c0_i32_1 = arith.constant 0 : i32
    %c0_i32_2 = arith.constant 0 : i32
    return %c0_i32, %c0_i32_0, %c0_i32_1 : i32, i32, i32
  }
}

module attributes {stable_mosaic.version = 11 : i64} {
  func.func @_normalize_kernel(%arg0: i32, %arg1: memref<7xf32, #tpu.memory_space<smem>>, %arg2: memref<1x128xf32, #tpu.memory_space<vmem>>, %arg3: memref<1x128xf32, #tpu.memory_space<vmem>>, %arg4: memref<1x128xf32, #tpu.memory_space<vmem>>) attributes {dimension_semantics = [#tpu.dimension_semantics<parallel>], iteration_bounds = array<i64: 1>, scalar_prefetch = 0 : i64, scratch_operands = 0 : i64, tpu.core_type = #tpu.core_type<tc>, window_params = [{transform_indices = @transform_0, window_bounds = array<i64: 7>}, {transform_indices = @transform_1, window_bounds = array<i64: 1, 128>}, {transform_indices = @transform_2, window_bounds = array<i64: 1, 128>}, {transform_indices = @transform_3, window_bounds = array<i64: 1, 128>}]} {
    %c0 = arith.constant 0 : index
    %0 = memref.load %arg1[%c0] : memref<7xf32, #tpu.memory_space<smem>>
    %c1 = arith.constant 1 : index
    %1 = memref.load %arg1[%c1] : memref<7xf32, #tpu.memory_space<smem>>
    %c2 = arith.constant 2 : index
    %2 = memref.load %arg1[%c2] : memref<7xf32, #tpu.memory_space<smem>>
    %c3 = arith.constant 3 : index
    %3 = memref.load %arg1[%c3] : memref<7xf32, #tpu.memory_space<smem>>
    %c4 = arith.constant 4 : index
    %4 = memref.load %arg1[%c4] : memref<7xf32, #tpu.memory_space<smem>>
    %c5 = arith.constant 5 : index
    %5 = memref.load %arg1[%c5] : memref<7xf32, #tpu.memory_space<smem>>
    %c6 = arith.constant 6 : index
    %6 = memref.load %arg1[%c6] : memref<7xf32, #tpu.memory_space<smem>>
    %c0_0 = arith.constant 0 : index
    %c0_1 = arith.constant 0 : index
    %7 = vector.load %arg2[%c0_0, %c0_1] : memref<1x128xf32, #tpu.memory_space<vmem>>, vector<1x128xf32>
    %c0_2 = arith.constant 0 : index
    %c0_3 = arith.constant 0 : index
    %8 = vector.load %arg3[%c0_2, %c0_3] : memref<1x128xf32, #tpu.memory_space<vmem>>, vector<1x128xf32>
    %9 = vector.broadcast %0 : f32 to vector<1x128xf32>
    %10 = arith.mulf %7, %9 : vector<1x128xf32>
    %11 = vector.broadcast %1 : f32 to vector<1x128xf32>
    %12 = arith.addf %10, %11 : vector<1x128xf32>
    %13 = math.tanh %12 : vector<1x128xf32>
    %14 = vector.broadcast %2 : f32 to vector<1x128xf32>
    %15 = arith.mulf %8, %14 : vector<1x128xf32>
    %16 = vector.broadcast %3 : f32 to vector<1x128xf32>
    %17 = arith.addf %15, %16 : vector<1x128xf32>
    %18 = math.tanh %17 : vector<1x128xf32>
    %19 = vector.broadcast %4 : f32 to vector<1x128xf32>
    %20 = arith.mulf %7, %19 : vector<1x128xf32>
    %21 = vector.broadcast %5 : f32 to vector<1x128xf32>
    %22 = arith.mulf %8, %21 : vector<1x128xf32>
    %23 = arith.addf %20, %22 : vector<1x128xf32>
    %24 = vector.broadcast %6 : f32 to vector<1x128xf32>
    %25 = arith.addf %23, %24 : vector<1x128xf32>
    %26 = arith.negf %25 : vector<1x128xf32>
    %27 = math.exp %26 : vector<1x128xf32>
    %cst = arith.constant 1.000000e+00 : f32
    %28 = vector.broadcast %cst : f32 to vector<1x128xf32>
    %29 = arith.addf %28, %27 : vector<1x128xf32>
    %30 = arith.divf %28, %29 : vector<1x128xf32>
    %31 = arith.subf %13, %18 : vector<1x128xf32>
    %32 = arith.mulf %30, %31 : vector<1x128xf32>
    %33 = arith.addf %18, %32 : vector<1x128xf32>
    %34 = arith.negf %33 : vector<1x128xf32>
    %35 = math.exp %34 : vector<1x128xf32>
    %cst_4 = arith.constant 1.000000e+00 : f32
    %36 = vector.broadcast %cst_4 : f32 to vector<1x128xf32>
    %37 = arith.addf %36, %35 : vector<1x128xf32>
    %38 = arith.divf %36, %37 : vector<1x128xf32>
    %c0_5 = arith.constant 0 : index
    %c0_6 = arith.constant 0 : index
    %39 = vector.load %arg4[%c0_5, %c0_6] : memref<1x128xf32, #tpu.memory_space<vmem>>, vector<1x128xf32>
    tpu.vector_store %arg4[%c0_5, %c0_6], %38 {strides = array<i32>} : memref<1x128xf32, #tpu.memory_space<vmem>>, vector<1x128xf32>,
    return
  }
  func.func @transform_0(%arg0: i32) -> i32 {
    %c0_i32 = arith.constant 0 : i32
    %c0_i32_0 = arith.constant 0 : i32
    return %c0_i32 : i32
  }
  func.func @transform_1(%arg0: i32) -> (i32, i32) {
    %c0_i32 = arith.constant 0 : i32
    %c0_i32_0 = arith.constant 0 : i32
    return %arg0, %c0_i32 : i32, i32
  }
  func.func @transform_2(%arg0: i32) -> (i32, i32) {
    %c0_i32 = arith.constant 0 : i32
    %c0_i32_0 = arith.constant 0 : i32
    return %arg0, %c0_i32 : i32, i32
  }
  func.func @transform_3(%arg0: i32) -> (i32, i32) {
    %c0_i32 = arith.constant 0 : i32
    %c0_i32_0 = arith.constant 0 : i32
    return %arg0, %c0_i32 : i32, i32
  }
}

</mosaic_0001>

<llo_original>
// kernel: gated_attention.2
$region0: #{gated_attention.2}
  #allocation0 [shape = 'u32[]', space=smem, size = 0x4, offset = 0x4, fixed_abs, tag = 'smem constant byte address 0x4 - core index']
  #allocation1 [shape = 'u32[72,128]{1,0:T(1,128)}', space=vmem, size = 0x9000, scoped, tag = 'internal scratch']
  %s0 = inlined_call_operand.vmem [shape: f32[1,128], index: 0, kind: input, shape index: {}]
  %s1 = inlined_call_operand.vmem [shape: f32[1,128], index: 1, kind: input, shape index: {}]
  %s2 = inlined_call_operand.vmem [shape: f32[4,1,128], index: 2, kind: output, shape index: {}]
  %s3 = sld [smem:[#allocation0]]
  $region22: #{gated_attention.2} parent=0
    _
  %s5 = ssub.s32 1, %s3
  %s6 = scalar_select 0, %s5, %s3
  // Predicated region
  $region2: #{gated_attention.2} parent=0 // pred_check
    _
  $region3: #{gated_attention.2} parent=0 // pred_check_branch
    %8 = sbr.rel (0) target = $region5
  $region4: #{gated_attention.2} parent=0 // pred_region
    _
  $region5: #{gated_attention.2} parent=0 // pred_fallthru
    _
  // Predicated region
  $region6: #{gated_attention.2} parent=0 // pred_check
    _
  $region7: #{gated_attention.2} parent=0 // pred_check_branch
    %10 = sbr.rel (0) target = $region9
  $region8: #{gated_attention.2} parent=0 // pred_region
    _
  $region9: #{gated_attention.2} parent=0 // pred_fallthru
    _
  %p11 = scmp.eq.s32.totalorder 0, 0
  // Predicated region
  $region10: #{gated_attention.2} parent=0 // pred_check
    %p12 = pneg %p11
  $region11: #{gated_attention.2} parent=0 // pred_check_branch
    %14 = sbr.rel (%p12) target = $region13
  $region12: #{gated_attention.2} parent=0 // pred_region
    %15 = vst [vmem:[%s2] sm:$0x1] 0.0
    %16 = vst [vmem:[%s2 + $0x1] sm:$0x1] 0.0
    %17 = vst [vmem:[%s2 + $0x2] sm:$0x1] 0.0
    %18 = vst [vmem:[%s2 + $0x3] sm:$0x1] 0.0
  $region13: #{gated_attention.2} parent=0 // pred_fallthru
    _
  %v19 = vld [vmem:[%s0] sm:$0x1]
  %v20 = vld [vmem:[%s1] sm:$0x1]
  %v21 = vld [vmem:[%s2] sm:$0x1]
  %v22 = vadd.f32 %v19, 0.0
  %v23 = vadd.f32 %v21, %v22
  %24 = vst [vmem:[%s2] sm:$0x1] %v23
  %s25 = scalar_lea.vmem %s2, 1
  %v26 = vld [vmem:[%s25] sm:$0x1]
  %v27 = vadd.f32 %v20, 0.0
  %v28 = vadd.f32 %v26, %v27
  %29 = vst [vmem:[%s25] sm:$0x1] %v28
  %s30 = scalar_lea.vmem %s2, 2
  %v31 = vld [vmem:[%s30] sm:$0x1]
  %v32 = vmul.f32 %v19, %v19
  %v33 = vadd.f32 %v32, 0.0
  %v34 = vadd.f32 %v31, %v33
  %35 = vst [vmem:[%s30] sm:$0x1] %v34
  %s36 = scalar_lea.vmem %s2, 3
  %v37 = vld [vmem:[%s36] sm:$0x1]
  %v38 = vmul.f32 %v20, %v20
  %v39 = vadd.f32 %v38, 0.0
  %v40 = vadd.f32 %v37, %v39
  %41 = vst [vmem:[%s36] sm:$0x1] %v40
  // Predicated region
  $region14: #{gated_attention.2} parent=0 // pred_check
    _
  $region15: #{gated_attention.2} parent=0 // pred_check_branch
    %43 = sbr.rel (0) target = $region17
  $region16: #{gated_attention.2} parent=0 // pred_region
    _
  $region17: #{gated_attention.2} parent=0 // pred_fallthru
    _
  // Predicated region
  $region18: #{gated_attention.2} parent=0 // pred_check
    _
  $region19: #{gated_attention.2} parent=0 // pred_check_branch
    %45 = sbr.rel (0) target = $region21
  $region20: #{gated_attention.2} parent=0 // pred_region
    _
  $region21: #{gated_attention.2} parent=0 // pred_fallthru
    _

// kernel: gated_attention.3
$region0: #{gated_attention.3}
  #allocation0 [shape = 'u32[]', space=smem, size = 0x4, offset = 0x4, fixed_abs, tag = 'smem constant byte address 0x4 - core index']
  #allocation1 [shape = 'u32[72,128]{1,0:T(1,128)}', space=vmem, size = 0x9000, scoped, tag = 'internal scratch']
  %s0 = inlined_call_operand.vmem [shape: f32[7], index: 0, kind: input, shape index: {}]
  %s1 = inlined_call_operand.vmem [shape: f32[1,128], index: 1, kind: input, shape index: {}]
  %s2 = inlined_call_operand.vmem [shape: f32[1,128], index: 2, kind: input, shape index: {}]
  %s3 = inlined_call_operand.vmem [shape: f32[1,128], index: 3, kind: output, shape index: {}]
  %s4 = sld [smem:[#allocation0]]
  $region26: #{gated_attention.3} parent=0
    _
  %s6 = ssub.s32 1, %s4
  %s7 = scalar_select 0, %s6, %s4
  $region1: #{gated_attention.3} parent=0
    #allocation2 [shape = 'u8[512]{0}', space=smem, size = 0x200, scoped, tag = 'input window, operand 0, single buffered']
    #allocation3 [shape = 's32[1]{0}', space=sflag, size = 0x4, scoped, tag = 'scoped memory for gated_attention.3']
    %8 = vsyncpa [#allocation3], 0
    // Predicated region
    $region2: #{gated_attention.3} parent=1 // pred_check
      _
    $region3: #{gated_attention.3} parent=1 // pred_check_branch
      %10 = sbr.rel (0) target = $region5
    $region4: #{gated_attention.3} parent=1 // pred_region
      %12 = vsyncadd [#allocation3], 0
      %s14 = sshll.u32 %s0, 4
      %s15 = int_to_ptr.vmem [resolvable:$true] %s14
      %17 = dma.vmem_to_smem %s15, 16, [#allocation2], [#allocation3]
    $region5: #{gated_attention.3} parent=1 // pred_fallthru
      _
    // Predicated region
    $region6: #{gated_attention.3} parent=1 // pred_check
      _
    $region7: #{gated_attention.3} parent=1 // pred_check_branch
      %19 = sbr.rel (0) target = $region9
    $region8: #{gated_attention.3} parent=1 // pred_region
      _
    $region9: #{gated_attention.3} parent=1 // pred_fallthru
      _
    // Predicated region
    $region10: #{gated_attention.3} parent=1 // pred_check
      _
    $region11: #{gated_attention.3} parent=1 // pred_check_branch
      %21 = sbr.rel (0) target = $region13
    $region12: #{gated_attention.3} parent=1 // pred_region
      _
    $region13: #{gated_attention.3} parent=1 // pred_fallthru
      _
    // Predicated region
    $region14: #{gated_attention.3} parent=1 // pred_check
      _
    $region15: #{gated_attention.3} parent=1 // pred_check_branch
      %23 = sbr.rel (0) target = $region17
    $region16: #{gated_attention.3} parent=1 // pred_region
      %25 = dma.done [#allocation3], 16
    $region17: #{gated_attention.3} parent=1 // pred_fallthru
      _
    %26 = sfence
    %s27 = sld [smem:[#allocation2]]
    %s28 = sld [smem:[#allocation2 + $0x1]]
    %s29 = sld [smem:[#allocation2 + $0x2]]
    %s30 = sld [smem:[#allocation2 + $0x3]]
    %s31 = sld [smem:[#allocation2 + $0x4]]
    %s32 = sld [smem:[#allocation2 + $0x5]]
    %s33 = sld [smem:[#allocation2 + $0x6]]
    %v34 = vld [vmem:[%s1] sm:$0x1]
    %v35 = vld [vmem:[%s2] sm:$0x1]
    %v36 = vstv %s27
    %v37 = vmul.f32 %v34, %v36
    %v38 = vstv %s28
    %v39 = vadd.f32 %v37, %v38
    %v40 = vtanh.pop %v39
    %v41 = vstv %s29
    %v42 = vmul.f32 %v35, %v41
    %v43 = vstv %s30
    %v44 = vadd.f32 %v42, %v43
    %v45 = vtanh.pop %v44
    %v46 = vstv %s31
    %v47 = vmul.f32 %v34, %v46
    %v48 = vstv %s32
    %v49 = vmul.f32 %v35, %v48
    %v50 = vadd.f32 %v47, %v49
    %v51 = vstv %s33
    %v52 = vadd.f32 %v50, %v51
    %v53 = vxor.u32 %v52, 2147483648
    %v54 = vmul.f32 %v53, 1.442695
    %v55 = vpow.pop %v54
    %v56 = vadd.f32 %v55, 1.0
    %v57 = vrcp.pop %v56
    %v58 = vmul.f32 %v56, %v57
    %v59 = vsub.f32 1.0, %v58
    %v60 = vmul.f32 %v57, %v59
    %v61 = vadd.f32 %v57, %v60
    %vm62 = vweird.f32 %v56
    %vm63 = vweird.f32 %v57
    %vm64 = vmor %vm62, %vm63
    %v65 = vsel %vm64, %v57, %v61
    %v66 = vand.u32 2147483647, %v56
    %vm67 = vcmp.eq.f32.partialorder %v66, 8.507059e+37
    %v68 = vand.u32 %v56, 2147483648
    %v69 = vor.u32 1.1754944e-38, %v68
    %v70 = vsel %vm67, %v69, %v65
    %v71 = vmul.f32 1.0, %v70
    %v72 = vsub.f32 %v40, %v45
    %v73 = vmul.f32 %v71, %v72
    %v74 = vadd.f32 %v45, %v73
    %v75 = vxor.u32 %v74, 2147483648
    %v76 = vmul.f32 %v75, 1.442695
    %v77 = vpow.pop %v76
    %v78 = vadd.f32 %v77, 1.0
    %v79 = vrcp.pop %v78
    %v80 = vmul.f32 %v78, %v79
    %v81 = vsub.f32 1.0, %v80
    %v82 = vmul.f32 %v79, %v81
    %v83 = vadd.f32 %v79, %v82
    %vm84 = vweird.f32 %v78
    %vm85 = vweird.f32 %v79
    %vm86 = vmor %vm84, %vm85
    %v87 = vsel %vm86, %v79, %v83
    %v88 = vand.u32 2147483647, %v78
    %vm89 = vcmp.eq.f32.partialorder %v88, 8.507059e+37
    %v90 = vand.u32 %v78, 2147483648
    %v91 = vor.u32 1.1754944e-38, %v90
    %v92 = vsel %vm89, %v91, %v87
    %v93 = vmul.f32 1.0, %v92
    %94 = vst [vmem:[%s3] sm:$0x1] %v93
    // Predicated region
    $region18: #{gated_attention.3} parent=1 // pred_check
      _
    $region19: #{gated_attention.3} parent=1 // pred_check_branch
      %96 = sbr.rel (0) target = $region21
    $region20: #{gated_attention.3} parent=1 // pred_region
      _
    $region21: #{gated_attention.3} parent=1 // pred_fallthru
      _
    // Predicated region
    $region22: #{gated_attention.3} parent=1 // pred_check
      _
    $region23: #{gated_attention.3} parent=1 // pred_check_branch
      %98 = sbr.rel (0) target = $region25
    $region24: #{gated_attention.3} parent=1 // pred_region
      _
    $region25: #{gated_attention.3} parent=1 // pred_fallthru
      _
    %99 = vsyncpa [#allocation3], 1

</llo_original>
